<compile_context>
chip_gen: v7x
topology: tpu7x:2x2x1
jax: 0.10.0
libtpu: 0.0.40
codegen_flags: <defaults>
</compile_context>

<pallas_src>
import functools

import jax
import jax.numpy as jnp
from jax import lax
from jax.experimental import pallas as pl
from jax.experimental.pallas import tpu as pltpu

ACC_ROWS = 8                 # sublanes of one f32 vreg -> accumulator is (8, width)
_STRIP_BYTES = 128 * 1024    # ~128 KiB of (lane-padded) input per inner strip
_MIB = 1024 * 1024


def _round_up(x, m):
    return ((x + m - 1) // m) * m


def _chip_config():
    """(target_block_bytes, n_cores) from the local TPU generation."""
    kind = ""
    try:
        kind = jax.devices()[0].device_kind.lower()
    except Exception:
        pass
    if "v7" in kind or "7x" in kind:
        # v7x: ~3.2 TB/s HBM per TC, 2 TensorCores/chip -> bigger blocks + core split.
        # 2 x 6 MiB double-buffered input + 4 KiB acc fits the 32 MiB scoped default.
        return 6 * _MIB, 2
    if "v5e" in kind or "v5 lite" in kind or "v5lite" in kind:
        # v5e: 16 MiB default scoped VMEM -> cap the block at 4 MiB (2 x 4 MiB buffers).
        return 4 * _MIB, 1
    # v6e / default: ~4 MiB blocks reach ~85%+ of the HBM roofline.
    return 4 * _MIB, 1


def _penalty_kernel(x_ref, o_ref, *, tile_rows, strip_rows, width,
                    blocks_per_core, total_rows, edge_possible, unroll):
    i = pl.program_id(0)          # core-split axis (size 1 or 2)
    j = pl.program_id(1)          # sequential reduction axis ("arbitrary")

    # Output block (i, 0) is revisited across j -> it is the per-core accumulator.
    @pl.when(j == 0)
    def _():
        o_ref[...] = jnp.zeros_like(o_ref)

    n_strips = tile_rows // strip_rows

    def _accumulate(mask_rows):
        # Strip-mined reduction: live state is a handful of vregs; no
        # tile-sized f32 temp in VMEM, VPU-only partial sums.
        if mask_rows:
            blk = i * blocks_per_core + j            # logical (unclamped) block index
            row0 = blk * tile_rows
            local = lax.broadcasted_iota(jnp.int32, (strip_rows, width), 0)  # hoisted

        def body(s, acc):
            r0 = pl.multiple_of(s * strip_rows, strip_rows)
            x = x_ref[pl.ds(r0, strip_rows), :].astype(jnp.float32)
            h = jnp.maximum(x * x - 1.0, 0.0)
            if mask_rows:
                h = jnp.where(row0 + s * strip_rows + local < total_rows, h, 0.0)
            return acc + h.reshape(strip_rows // ACC_ROWS, ACC_ROWS, width).sum(axis=0)

        acc0 = jnp.zeros((ACC_ROWS, width), jnp.float32)
        acc = lax.fori_loop(0, n_strips, body, acc0, unroll=unroll)
        o_ref[...] += acc

    if not edge_possible:
        # Every block is fully valid: no mask code is even emitted.
        _accumulate(mask_rows=False)
    else:
        blk = i * blocks_per_core + j
        is_full = (blk + 1) * tile_rows <= total_rows   # all rows of this block valid

        @pl.when(is_full)
        def _():
            _accumulate(mask_rows=False)

        @pl.when(jnp.logical_not(is_full))
        def _():
            _accumulate(mask_rows=True)


def _hinge_sum_f32(x):
    xf = x.astype(jnp.float32)
    return jnp.sum(jnp.maximum(xf * xf - 1.0, 0.0))


def penalty(pred: jax.Array) -> jax.Array:
    """Scalar f32: mean(max(pred**2 - 1, 0)) over all elements of `pred`."""
    n = pred.size
    if n == 0:
        return jnp.float32(jnp.nan)          # torch.mean of an empty tensor is nan

    flat = pred.reshape(-1)                  # free (bitcast) reshape, original dtype

    # Widest lane dimension (<=128) dividing the element count => (rows, width)
    # is a zero-copy view of the input (no jnp.pad HBM copy).
    tail_sum = jnp.float32(0.0)
    width = None
    for w in (128, 64, 32, 16, 8):
        if n % w == 0:
            width = w
            break
    if width is None:
        # Degenerate case: element count not a multiple of 8.  Peel the last
        # n % 8 (<8) elements off in plain jnp and run the kernel on the
        # aligned prefix.
        # TODO(synk): the prefix slice still materializes one copy in HBM; a
        # fully copy-free ragged path needs 1-D blocks + element-level masks.
        r = n % 8
        tail_sum = _hinge_sum_f32(flat[n - r:])
        n_main = n - r
        if n_main == 0:
            return (tail_sum / jnp.float32(n)).astype(jnp.float32)
        flat = flat[:n_main]
        for w in (128, 64, 32, 16, 8):
            if n_main % w == 0:
                width = w
                break
    rows = flat.size // width
    x2d = flat.reshape(rows, width)

    itemsize = jnp.dtype(pred.dtype).itemsize
    target_bytes, n_cores = _chip_config()
    padded_width = max(width, 128)           # lane padding in VMEM layout

    # Inner strip: ~128 KiB of (lane-padded) data, multiple of 8 rows.
    strip_rows = (_STRIP_BYTES // (padded_width * itemsize)) // ACC_ROWS * ACC_ROWS
    strip_rows = max(ACC_ROWS, min(512, strip_rows))
    strip_rows = min(strip_rows, _round_up(rows, ACC_ROWS))

    # Outer block (what BlockSpec DMAs): sized in BYTES (generation aware), a
    # multiple of strip_rows, and never bigger than the whole (rounded) array.
    tile_rows = (target_bytes // (padded_width * itemsize)) // strip_rows * strip_rows
    tile_rows = max(strip_rows, tile_rows)
    tile_rows = min(tile_rows, _round_up(rows, strip_rows))

    n_blocks = -(-rows // tile_rows)
    if n_blocks < 2:
        n_cores = 1                          # nothing to split across cores
    blocks_per_core = -(-n_blocks // n_cores)
    edge_possible = (rows % tile_rows != 0) or (n_cores * blocks_per_core != n_blocks)

    n_strips = tile_rows // strip_rows
    unroll = True if n_strips <= 8 else 4

    kernel = functools.partial(
        _penalty_kernel,
        tile_rows=tile_rows, strip_rows=strip_rows, width=width,
        blocks_per_core=blocks_per_core, total_rows=rows,
        edge_possible=edge_possible, unroll=unroll)

    if n_cores * blocks_per_core == n_blocks:
        def in_map(i, j):
            return (i * blocks_per_core + j, 0)
    else:
        def in_map(i, j):
            # Clamp the (at most one) duplicated trailing block into range; its
            # contribution is fully masked inside the kernel.
            return (jnp.minimum(i * blocks_per_core + j, n_blocks - 1), 0)

    if n_cores == 2:
        # v7x: make sure the two TensorCores each stream their own half.
        core_sem = getattr(pltpu, "CORE_PARALLEL", "parallel")
        semantics = (core_sem, "arbitrary")
    else:
        semantics = ("arbitrary", "arbitrary")

    partials = pl.pallas_call(
        kernel,
        out_shape=jax.ShapeDtypeStruct((n_cores * ACC_ROWS, width), jnp.float32),
        grid_spec=pltpu.PrefetchScalarGridSpec(
            num_scalar_prefetch=0,
            grid=(n_cores, blocks_per_core),
            in_specs=[pl.BlockSpec((tile_rows, width), in_map)],
            out_specs=pl.BlockSpec((ACC_ROWS, width), lambda i, j: (i, 0)),
        ),
        compiler_params=pltpu.CompilerParams(dimension_semantics=semantics),
    )(x2d)

    # Single cross-lane reduction on a tiny array; mean over the ORIGINAL count.
    total = jnp.sum(partials) + tail_sum
    return (total / jnp.float32(n)).astype(jnp.float32)


def penalty_ref(pred: jax.Array) -> jax.Array:
    h = pred.astype(jnp.float32) ** 2 - 1.0
    return jnp.mean(jnp.maximum(h, 0.0))


if __name__ == "__main__":
    key = jax.random.PRNGKey(0)
    k1, k2, k3, k4 = jax.random.split(key, 4)

    cases = [
        # Primary case: small NCHW-like prediction tensor (batch=2, ch=4, 16x16),
        # lane-aligned -> zero-copy path, no masks.
        jax.random.normal(k1, (2, 4, 16, 16), dtype=jnp.float32) * 2.0,
        # Lane-ragged case (240 elems -> width=16, partial block + edge mask).
        jax.random.normal(k2, (2, 3, 4, 10), dtype=jnp.float32) * 2.0,
        # bf16 case: original-dtype HBM read, in-kernel upcast.
        (jax.random.normal(k3, (4, 256), dtype=jnp.float32) * 2.0).astype(jnp.bfloat16),
        # Degenerate odd-sized case (1155 elems -> jnp tail + aligned prefix).
        jax.random.normal(k4, (3, 5, 7, 11), dtype=jnp.float32) * 2.0,
    ]

    for x in cases:
        out = jax.block_until_ready(penalty(x))
        ref = jax.block_until_ready(penalty_ref(x))
        assert jnp.allclose(out, ref, rtol=1e-5, atol=1e-5), (x.shape, out, ref)

    print("KERNEL_OK")
</pallas_src>

<mosaic_0001>
module attributes {stable_mosaic.version = 11 : i64} {
  func.func @_penalty_kernel(%arg0: i32, %arg1: i32, %arg2: memref<16x128xf32, #tpu.memory_space<vmem>>, %arg3: memref<8x128xf32, #tpu.memory_space<vmem>>) attributes {dimension_semantics = [#tpu.dimension_semantics<arbitrary>, #tpu.dimension_semantics<arbitrary>], iteration_bounds = array<i64: 1, 1>, scalar_prefetch = 0 : i64, scratch_operands = 0 : i64, tpu.core_type = #tpu.core_type<tc>, window_params = [{transform_indices = @transform_0, window_bounds = array<i64: 16, 128>}, {transform_indices = @transform_1, window_bounds = array<i64: 8, 128>}]} {
    %c0_i32 = arith.constant 0 : i32
    %0 = arith.cmpi eq, %arg1, %c0_i32 : i32
    %1 = arith.extui %0 : i1 to i32
    %c0_i32_0 = arith.constant 0 : i32
    %2 = arith.cmpi ne, %1, %c0_i32_0 : i32
    scf.if %2 {
      %cst_9 = arith.constant 0.000000e+00 : f32
      %19 = vector.broadcast %cst_9 : f32 to vector<8x128xf32>
      %c0_10 = arith.constant 0 : index
      %c0_11 = arith.constant 0 : index
      %20 = vector.load %arg3[%c0_10, %c0_11] : memref<8x128xf32, #tpu.memory_space<vmem>>, vector<8x128xf32>
      tpu.vector_store %arg3[%c0_10, %c0_11], %19 {strides = array<i32>} : memref<8x128xf32, #tpu.memory_space<vmem>>, vector<8x128xf32>,
    } else {
    }
    %cst = arith.constant 0.000000e+00 : f32
    %3 = vector.broadcast %cst : f32 to vector<8x128xf32>
    %c0_i32_1 = arith.constant 0 : i32
    %c16_i32 = arith.constant 16 : i32
    %4 = arith.muli %c0_i32_1, %c16_i32 : i32
    %5 = tpu.assume_multiple %4, 16 : i32
    %6 = arith.index_cast %5 : i32 to index
    %c0 = arith.constant 0 : index
    %7 = vector.load %arg2[%6, %c0] : memref<16x128xf32, #tpu.memory_space<vmem>>, vector<16x128xf32>
    %8 = arith.mulf %7, %7 : vector<16x128xf32>
    %cst_2 = arith.constant 1.000000e+00 : f32
    %9 = vector.broadcast %cst_2 : f32 to vector<16x128xf32>
    %10 = arith.subf %8, %9 : vector<16x128xf32>
    %cst_3 = arith.constant 0.000000e+00 : f32
    %11 = vector.broadcast %cst_3 : f32 to vector<16x128xf32>
    %12 = arith.maximumf %10, %11 : vector<16x128xf32>
    %13 = vector.shape_cast %12 : vector<16x128xf32> to vector<2x8x128xf32>
    %cst_4 = arith.constant dense<0.000000e+00> : vector<8x128xf32>
    %14 = vector.multi_reduction <add>, %13, %cst_4 [0] : vector<2x8x128xf32> to vector<8x128xf32>
    %15 = arith.addf %3, %14 : vector<8x128xf32>
    %c1_i32 = arith.constant 1 : i32
    %c0_5 = arith.constant 0 : index
    %c0_6 = arith.constant 0 : index
    %16 = vector.load %arg3[%c0_5, %c0_6] : memref<8x128xf32, #tpu.memory_space<vmem>>, vector<8x128xf32>
    %17 = arith.addf %16, %15 : vector<8x128xf32>
    %c0_7 = arith.constant 0 : index
    %c0_8 = arith.constant 0 : index
    %18 = vector.load %arg3[%c0_7, %c0_8] : memref<8x128xf32, #tpu.memory_space<vmem>>, vector<8x128xf32>
    tpu.vector_store %arg3[%c0_7, %c0_8], %17 {strides = array<i32>} : memref<8x128xf32, #tpu.memory_space<vmem>>, vector<8x128xf32>,
    return
  }
  func.func @transform_0(%arg0: i32, %arg1: i32) -> (i32, i32) {
    %c1_i32 = arith.constant 1 : i32
    %0 = arith.muli %arg0, %c1_i32 : i32
    %1 = arith.addi %0, %arg1 : i32
    %c0_i32 = arith.constant 0 : i32
    %c0_i32_0 = arith.constant 0 : i32
    return %1, %c0_i32 : i32, i32
  }
  func.func @transform_1(%arg0: i32, %arg1: i32) -> (i32, i32) {
    %c0_i32 = arith.constant 0 : i32
    %c0_i32_0 = arith.constant 0 : i32
    return %arg0, %c0_i32 : i32, i32
  }
}

</mosaic_0001>

<llo_original>
// kernel: tpu_custom_call.1
$region0: #{tpu_custom_call.1}
  #allocation0 [shape = 'u32[]', space=smem, size = 0x4, offset = 0x4, fixed_abs, tag = 'smem constant byte address 0x4 - core index']
  #allocation1 [shape = 'u32[144,128]{1,0:T(1,128)}', space=vmem, size = 0x12000, scoped, tag = 'internal scratch']
  %s0 = inlined_call_operand.hbm [shape: f32[16,128], index: 0, kind: input, shape index: {}]
  %s1 = inlined_call_operand.hbm [shape: f32[8,128], index: 1, kind: output, shape index: {}]
  %s2 = sld [smem:[#allocation0]]
  $region22: #{tpu_custom_call.1} parent=0
    _
  %s4 = ssub.s32 1, %s2
  %s5 = scalar_select 0, %s4, %s2
  $region1: #{tpu_custom_call.1} parent=0
    #allocation2 [shape = 'u8[8192]{0}', space=vmem, size = 0x2000, scoped, tag = 'input window, operand 0, single buffered']
    #allocation3 [shape = 's32[1]{0}', space=sflag, size = 0x4, scoped, tag = 'scoped memory for tpu_custom_call.1']
    #allocation4 [shape = 's32[1]{0}', space=sflag, size = 0x4, scoped, tag = 'scoped memory for tpu_custom_call.1']
    #allocation5 [shape = 'u8[4096]{0}', space=vmem, size = 0x1000, scoped, tag = 'output window, operand 0, single buffered']
    %6 = vsyncpa [#allocation3], 0
    %7 = vsyncpa [#allocation4], 0
    // Predicated region
    $region2: #{tpu_custom_call.1} parent=1 // pred_check
      _
    $region3: #{tpu_custom_call.1} parent=1 // pred_check_branch
      %9 = sbr.rel (0) target = $region5
    $region4: #{tpu_custom_call.1} parent=1 // pred_region
      %s10 = sadd.s32 0, 0
      %s11 = smul.u32 2, %s10
      %s13 = ssub.s32 256, 256
      %14 = vsyncadd [#allocation3], %s13
      %s15 = smul.addr %s11, 128
      %s16 = scalar_lea.hbm %s0, %s15
      %s17 = sshll.u32 [#allocation2], 4
      %s18 = int_to_ptr.vmem [resolvable:$true] %s17
      %23 = dma.hbm_to_vmem [thread:$0]  %s16, 256, %s18, [#allocation3], 128, 128, 8
    $region5: #{tpu_custom_call.1} parent=1 // pred_fallthru
      _
    // Predicated region
    $region6: #{tpu_custom_call.1} parent=1 // pred_check
      _
    $region7: #{tpu_custom_call.1} parent=1 // pred_check_branch
      %25 = sbr.rel (0) target = $region9
    $region8: #{tpu_custom_call.1} parent=1 // pred_region
      %26 = dma.done [#allocation3], 256
    $region9: #{tpu_custom_call.1} parent=1 // pred_fallthru
      _
    %s27 = sadd.s32 0, 0
    %s28 = smul.u32 2, %s27
    %p29 = scmp.eq.s32.totalorder 0, 0
    // Predicated region
    $region10: #{tpu_custom_call.1} parent=1 // pred_check
      %p30 = pneg %p29
    $region11: #{tpu_custom_call.1} parent=1 // pred_check_branch
      %32 = sbr.rel (%p30) target = $region13
    $region12: #{tpu_custom_call.1} parent=1 // pred_region
      %33 = vst [vmem:[#allocation5] sm:$0xff] 0.0
    $region13: #{tpu_custom_call.1} parent=1 // pred_fallthru
      _
    %v34 = vld [vmem:[#allocation2] sm:$0xff]
    %v35 = vld [vmem:[#allocation2 + $0x8] sm:$0xff]
    %v36 = vmul.f32 %v34, %v34
    %v37 = vmul.f32 %v35, %v35
    %v38 = vsub.f32 %v36, 1.0
    %v39 = vsub.f32 %v37, 1.0
    %v40 = vmax.f32 %v38, 0.0
    %v41 = vmax.f32 %v39, 0.0
    %v42 = vadd.f32 %v40, %v41
    %v43 = vadd.f32 %v42, 0.0
    %v44 = vld [vmem:[#allocation5] sm:$0xff]
    %v45 = vadd.f32 %v44, %v43
    %46 = vst [vmem:[#allocation5] sm:$0xff] %v45
    // Predicated region
    $region14: #{tpu_custom_call.1} parent=1 // pred_check
      _
    $region15: #{tpu_custom_call.1} parent=1 // pred_check_branch
      %48 = sbr.rel (0) target = $region17
    $region16: #{tpu_custom_call.1} parent=1 // pred_region
      %s50 = ssub.s32 128, 128
      %51 = vsyncadd [#allocation4], %s50
      %s53 = sshll.u32 [#allocation5], 4
      %s54 = int_to_ptr.vmem [resolvable:$true] %s53
      %56 = dma.vmem_to_hbm [thread:$0]  %s54, 128, %s1, [#allocation4]
    $region17: #{tpu_custom_call.1} parent=1 // pred_fallthru
      _
    // Predicated region
    $region18: #{tpu_custom_call.1} parent=1 // pred_check
      _
    $region19: #{tpu_custom_call.1} parent=1 // pred_check_branch
      %58 = sbr.rel (0) target = $region21
    $region20: #{tpu_custom_call.1} parent=1 // pred_region
      %59 = dma.done [#allocation4], 128
    $region21: #{tpu_custom_call.1} parent=1 // pred_fallthru
      _
    %60 = vsyncpa [#allocation3], 1
    %61 = vsyncpa [#allocation4], 1

</llo_original>
